<compile_context>
chip_gen: v7x
topology: tpu7x:2x2x1
jax: 0.10.0
libtpu: 0.0.40
codegen_flags: <defaults>
</compile_context>

<pallas_src>
import jax
import jax.numpy as jnp
from jax.experimental import pallas as pl
from jax.experimental.pallas import tpu as pltpu


# -----------------------------------------------------------------------------
# Kernel bodies
# -----------------------------------------------------------------------------
def _gelu_tanh(h):
    """GELU (tanh form) on an f32 tile.  h*h hoisted to save one VPU multiply."""
    h2 = h * h
    inner = 0.7978845608028654 * h * (1.0 + 0.044715 * h2)  # sqrt(2/pi)
    return 0.5 * h * (1.0 + jnp.tanh(inner))


def _mlp_kernel_resident(x_ref, w1_ref, b1_ref, w2_ref, b2_ref, o_ref):
    """Fused fc1 -> GELU -> fc2 on one row tile; both weights resident in VMEM.

    x_ref  : (TM, Din)   VMEM
    w1_ref : (Din, Dh)   VMEM (resident, single-buffered)
    b1_ref : (1, Dh)     VMEM
    w2_ref : (Dh, Dout)  VMEM (resident, single-buffered)
    b2_ref : (1, Dout)   VMEM
    o_ref  : (TM, Dout)  VMEM
    """
    h = jnp.dot(x_ref[...], w1_ref[...], preferred_element_type=jnp.float32)
    h = h + b1_ref[...].astype(jnp.float32)
    h = _gelu_tanh(h)
    y = jnp.dot(h.astype(w2_ref.dtype), w2_ref[...],
                preferred_element_type=jnp.float32)
    y = y + b2_ref[...].astype(jnp.float32)
    o_ref[...] = y.astype(o_ref.dtype)


def _mlp_kernel_hidden_tiled(x_ref, w1_ref, b1_ref, w2_ref, b2_ref, o_ref,
                             acc_ref):
    """Fused MLP streaming Dh in chunks; fc2 partials accumulate in VMEM.

    Grid = (row tiles, Dh chunks); axis 1 is a reduction ("arbitrary").
    x_ref  : (TM, Din)    w1_ref : (Din, tdh)    b1_ref : (1, tdh)
    w2_ref : (tdh, Dout)  b2_ref : (1, Dout)     o_ref  : (TM, Dout)
    acc_ref: (TM, Dout) f32 scratch accumulator.
    """
    k = pl.program_id(1)

    @pl.when(k == 0)
    def _():
        acc_ref[...] = jnp.zeros_like(acc_ref)

    h = jnp.dot(x_ref[...], w1_ref[...], preferred_element_type=jnp.float32)
    h = h + b1_ref[...].astype(jnp.float32)
    h = _gelu_tanh(h)
    acc_ref[...] += jnp.dot(h.astype(w2_ref.dtype), w2_ref[...],
                            preferred_element_type=jnp.float32)

    @pl.when(k == pl.num_programs(1) - 1)
    def _():
        y = acc_ref[...] + b2_ref[...].astype(jnp.float32)
        o_ref[...] = y.astype(o_ref.dtype)


# -----------------------------------------------------------------------------
# Tiling / budget helpers
# -----------------------------------------------------------------------------
_RESIDENT_WEIGHT_BUDGET = 40 * 1024 * 1024  # above this, stream Dh chunks


def _pick_tm(m):
    if m >= 512:
        return 256            # fill the 256x256 MXU M dimension (v6e/v7x)
    if m >= 16:
        # Guarantee >= 2 grid steps so the "parallel" axis shards across
        # v7x's two TensorCores; keep the tile a multiple of 8 sublanes.
        half = -(-m // 2)
        return min(m, -(-half // 8) * 8)
    return m


def _pick_tdh(dh, hidden_tile):
    """Largest multiple of 128 that exactly divides Dh and is <= hidden_tile.

    Exact divisibility is required: a padded Dh chunk would feed garbage into
    the fc2 accumulator.  Falls back to the whole hidden dim if none exists.
    """
    if dh <= hidden_tile:
        return dh
    t = (hidden_tile // 128) * 128
    while t >= 128:
        if dh % t == 0:
            return t
        t -= 128
    return dh


def _vmem_limit_bytes(budget):
    try:
        cap = int(pltpu.get_tpu_info().vmem_capacity_bytes)
    except Exception:
        cap = 64 << 20        # v7x physical VMEM per TensorCore (smallest gen)
    return int(min(max(int(budget * 1.3) + (2 << 20), 32 << 20), cap))


def _cost_estimate(m, din, dh, dout, act_itemsize, w_itemsize):
    return pl.CostEstimate(
        flops=2 * m * (din * dh + dh * dout),
        transcendentals=m * dh,
        bytes_accessed=(m * (din + dout) * act_itemsize
                        + (din * dh + dh * dout) * w_itemsize
                        + (dh + dout) * 4),
    )


def _resident_spec(shape, index_map, single_buffer):
    """BlockSpec for a block whose index_map is constant across the grid.

    Single-buffered when supported: it is DMA'd exactly once, so the default
    double-buffering only doubles its VMEM footprint.
    """
    if single_buffer and hasattr(pl, "Buffered"):
        try:
            return pl.BlockSpec(shape, index_map, pipeline_mode=pl.Buffered(1))
        except TypeError:     # older jax: BlockSpec has no pipeline_mode kwarg
            pass
    return pl.BlockSpec(shape, index_map)


# -----------------------------------------------------------------------------
# pallas_call builders
# -----------------------------------------------------------------------------
def _mlp_call_resident(x2, w1, b1r, w2, b2r, tm, single_buffer):
    m, din = x2.shape
    dh = w1.shape[-1]
    dout = w2.shape[-1]
    act = x2.dtype.itemsize
    wit = w1.dtype.itemsize

    wbytes = (din * dh + dh * dout) * wit + (dh + dout) * b1r.dtype.itemsize
    weight_bufs = 1 if single_buffer else 2
    budget = (weight_bufs * wbytes
              + 2 * tm * din * act           # x tile (double buffered)
              + 2 * tm * dout * act          # out tile (double buffered)
              + tm * dh * (4 + act))         # f32 hidden temp + cast copy

    return pl.pallas_call(
        _mlp_kernel_resident,
        out_shape=jax.ShapeDtypeStruct((m, dout), x2.dtype),
        grid=(pl.cdiv(m, tm),),
        in_specs=[
            pl.BlockSpec((tm, din), lambda i: (i, 0)),                  # x rows
            _resident_spec((din, dh), lambda i: (0, 0), single_buffer),  # w1
            _resident_spec((1, dh), lambda i: (0, 0), single_buffer),    # b1
            _resident_spec((dh, dout), lambda i: (0, 0), single_buffer),  # w2
            _resident_spec((1, dout), lambda i: (0, 0), single_buffer),   # b2
        ],
        out_specs=pl.BlockSpec((tm, dout), lambda i: (i, 0)),
        compiler_params=pltpu.CompilerParams(
            dimension_semantics=("parallel",),
            vmem_limit_bytes=_vmem_limit_bytes(budget)),
        cost_estimate=_cost_estimate(m, din, dh, dout, act, wit),
    )(x2, w1, b1r, w2, b2r)


def _mlp_call_hidden_tiled(x2, w1, b1r, w2, b2r, tm, tdh):
    m, din = x2.shape
    dh = w1.shape[-1]
    dout = w2.shape[-1]
    act = x2.dtype.itemsize
    wit = w1.dtype.itemsize

    budget = (2 * (din * tdh + tdh * dout) * wit    # streamed weight chunks
              + 2 * (tdh + dout) * b1r.dtype.itemsize
              + 2 * tm * din * act
              + 2 * tm * dout * act
              + tm * tdh * (4 + act)                # f32 hidden chunk + cast
              + tm * dout * 4)                      # accumulator scratch

    return pl.pallas_call(
        _mlp_kernel_hidden_tiled,
        out_shape=jax.ShapeDtypeStruct((m, dout), x2.dtype),
        grid=(pl.cdiv(m, tm), dh // tdh),
        in_specs=[
            pl.BlockSpec((tm, din), lambda i, k: (i, 0)),    # x rows (reused over k)
            pl.BlockSpec((din, tdh), lambda i, k: (0, k)),   # w1 column chunk
            pl.BlockSpec((1, tdh), lambda i, k: (0, k)),     # b1 chunk
            pl.BlockSpec((tdh, dout), lambda i, k: (k, 0)),  # w2 row chunk
            pl.BlockSpec((1, dout), lambda i, k: (0, 0)),    # b2 (resident)
        ],
        out_specs=pl.BlockSpec((tm, dout), lambda i, k: (i, 0)),
        scratch_shapes=[pltpu.VMEM((tm, dout), jnp.float32)],
        compiler_params=pltpu.CompilerParams(
            dimension_semantics=("parallel", "arbitrary"),
            vmem_limit_bytes=_vmem_limit_bytes(budget)),
        cost_estimate=_cost_estimate(m, din, dh, dout, act, wit),
    )(x2, w1, b1r, w2, b2r)


# -----------------------------------------------------------------------------
# Public wrapper
# -----------------------------------------------------------------------------
def mlp_forward(x, w1, b1, w2, b2, *, compute_dtype=None, hidden_tile=512,
                force_hidden_tiling=False):
    """Mlp.forward.  x: (..., Din).  Weights stored transposed w.r.t. PyTorch:
    w1 (Din, Dh), w2 (Dh, Dout); biases b1 (Dh,), b2 (Dout,).

    compute_dtype: optionally cast x/w1/w2 (e.g. jnp.bfloat16) for the native
    bf16 MXU path; accumulation always stays f32.  Returns (..., Dout).
    """
    din, dh = w1.shape
    dout = w2.shape[-1]

    if compute_dtype is not None:
        x = x.astype(compute_dtype)
        w1 = w1.astype(compute_dtype)
        w2 = w2.astype(compute_dtype)

    lead_shape = x.shape[:-1]
    x2 = x.reshape(-1, din)
    m = x2.shape[0]
    tm = _pick_tm(m)
    b1r = b1.reshape(1, dh)
    b2r = b2.reshape(1, dout)

    wbytes = (din * dh + dh * dout) * w1.dtype.itemsize
    use_hidden_tiling = force_hidden_tiling or wbytes > _RESIDENT_WEIGHT_BUDGET

    if use_hidden_tiling:
        tdh = _pick_tdh(dh, hidden_tile)
        y2 = _mlp_call_hidden_tiled(x2, w1, b1r, w2, b2r, tm, tdh)
    else:
        try:
            y2 = _mlp_call_resident(x2, w1, b1r, w2, b2r, tm,
                                    single_buffer=True)
        except Exception:
            # Fallback for jax versions where pl.Buffered(1) / pipeline_mode
            # is not accepted by the TPU pipeliner.
            y2 = _mlp_call_resident(x2, w1, b1r, w2, b2r, tm,
                                    single_buffer=False)

    return y2.reshape(*lead_shape, dout)


def _ref_mlp(x, w1, b1, w2, b2):
    """Pure-JAX reference (same tanh-GELU formulation) for correctness."""
    h = jnp.dot(x, w1) + b1
    c = 0.7978845608028654
    h = 0.5 * h * (1.0 + jnp.tanh(c * (h + 0.044715 * h ** 3)))
    return jnp.dot(h, w2) + b2


if __name__ == "__main__":
    key = jax.random.PRNGKey(0)

    def make_params(k, din, dh, dout):
        kw1, kb1, kw2, kb2 = jax.random.split(k, 4)
        s1 = 1.0 / din ** 0.5
        w1 = jax.random.uniform(kw1, (din, dh), jnp.float32, -s1, s1)
        b1 = jax.random.uniform(kb1, (dh,), jnp.float32, -s1, s1)
        s2 = 1.0 / dh ** 0.5
        w2 = jax.random.uniform(kw2, (dh, dout), jnp.float32, -s2, s2)
        b2 = jax.random.uniform(kb2, (dout,), jnp.float32, -s2, s2)
        return w1, b1, w2, b2

    # Case 1: weight-resident path, f32 (transformer-MLP-like small shapes:
    # batch=2, seq=16, in=32, hidden=64, out=32 -> M=32, TM=16, 2 grid steps).
    B, S, DIN, DH, DOUT = 2, 16, 32, 64, 32
    kx, kp, kx2, kp2 = jax.random.split(key, 4)
    x = jax.random.normal(kx, (B, S, DIN), jnp.float32)
    w1, b1, w2, b2 = make_params(kp, DIN, DH, DOUT)

    out = jax.block_until_ready(mlp_forward(x, w1, b1, w2, b2))
    assert out.shape == (B, S, DOUT)
    ref = _ref_mlp(x, w1, b1, w2, b2)
    err = float(jnp.max(jnp.abs(out - ref)))
    assert jnp.allclose(out, ref, atol=1e-3, rtol=1e-3), err

    # Case 2: hidden-dim-tiled path (forced), 2 reduction steps over Dh=256.
    DH2 = 256
    xb = jax.random.normal(kx2, (B, S, DIN), jnp.float32)
    pw1, pb1, pw2, pb2 = make_params(kp2, DIN, DH2, DOUT)
    out2 = jax.block_until_ready(
        mlp_forward(xb, pw1, pb1, pw2, pb2,
                    force_hidden_tiling=True, hidden_tile=128))
    ref2 = _ref_mlp(xb, pw1, pb1, pw2, pb2)
    err2 = float(jnp.max(jnp.abs(out2 - ref2)))
    assert jnp.allclose(out2, ref2, atol=1e-3, rtol=1e-3), err2

    # Case 3: bf16 MXU path (f32 accumulation), looser tolerance.
    out3 = jax.block_until_ready(
        mlp_forward(x, w1, b1, w2, b2, compute_dtype=jnp.bfloat16))
    err3 = float(jnp.max(jnp.abs(out3.astype(jnp.float32) - ref)))
    assert jnp.allclose(out3.astype(jnp.float32), ref,
                        atol=5e-2, rtol=5e-2), err3

    print("KERNEL_OK")
</pallas_src>

<mosaic_0001>
module attributes {stable_mosaic.version = 11 : i64} {
  func.func @_mlp_kernel_resident(%arg0: i32, %arg1: memref<16x32xf32, #tpu.memory_space<vmem>>, %arg2: memref<32x64xf32, #tpu.memory_space<vmem>>, %arg3: memref<1x64xf32, #tpu.memory_space<vmem>>, %arg4: memref<64x32xf32, #tpu.memory_space<vmem>>, %arg5: memref<1x32xf32, #tpu.memory_space<vmem>>, %arg6: memref<16x32xf32, #tpu.memory_space<vmem>>) attributes {dimension_semantics = [#tpu.dimension_semantics<parallel>], iteration_bounds = array<i64: 2>, scalar_prefetch = 0 : i64, scratch_operands = 0 : i64, tpu.core_type = #tpu.core_type<tc>, window_params = [{transform_indices = @transform_0, window_bounds = array<i64: 16, 32>}, {pipeline_mode = #tpu.pipeline_mode<synchronous>, transform_indices = @transform_1, window_bounds = array<i64: 32, 64>}, {pipeline_mode = #tpu.pipeline_mode<synchronous>, transform_indices = @transform_2, window_bounds = array<i64: 1, 64>}, {pipeline_mode = #tpu.pipeline_mode<synchronous>, transform_indices = @transform_3, window_bounds = array<i64: 64, 32>}, {pipeline_mode = #tpu.pipeline_mode<synchronous>, transform_indices = @transform_4, window_bounds = array<i64: 1, 32>}, {transform_indices = @transform_5, window_bounds = array<i64: 16, 32>}]} {
    %c0 = arith.constant 0 : index
    %c0_0 = arith.constant 0 : index
    %0 = vector.load %arg1[%c0, %c0_0] : memref<16x32xf32, #tpu.memory_space<vmem>>, vector<16x32xf32>
    %c0_1 = arith.constant 0 : index
    %c0_2 = arith.constant 0 : index
    %1 = vector.load %arg2[%c0_1, %c0_2] : memref<32x64xf32, #tpu.memory_space<vmem>>, vector<32x64xf32>
    %cst = arith.constant dense<0.000000e+00> : vector<16x64xf32>
    %2 = tpu.matmul %0, %1, %cst {dimension_numbers = #tpu.dot_dimension_numbers<[1], [0], [0], [1], [0, 0, 1, 1], [], []>} : vector<16x32xf32>, vector<32x64xf32>, vector<16x64xf32> -> vector<16x64xf32>
    %c0_3 = arith.constant 0 : index
    %c0_4 = arith.constant 0 : index
    %3 = vector.load %arg3[%c0_3, %c0_4] : memref<1x64xf32, #tpu.memory_space<vmem>>, vector<1x64xf32>
    %4 = vector.broadcast %3 : vector<1x64xf32> to vector<16x64xf32>
    %5 = arith.addf %2, %4 : vector<16x64xf32>
    %6 = arith.mulf %5, %5 : vector<16x64xf32>
    %cst_5 = arith.constant 0.797884583 : f32
    %7 = vector.broadcast %cst_5 : f32 to vector<16x64xf32>
    %8 = arith.mulf %7, %5 : vector<16x64xf32>
    %cst_6 = arith.constant 4.471500e-02 : f32
    %9 = vector.broadcast %cst_6 : f32 to vector<16x64xf32>
    %10 = arith.mulf %9, %6 : vector<16x64xf32>
    %cst_7 = arith.constant 1.000000e+00 : f32
    %11 = vector.broadcast %cst_7 : f32 to vector<16x64xf32>
    %12 = arith.addf %11, %10 : vector<16x64xf32>
    %13 = arith.mulf %8, %12 : vector<16x64xf32>
    %cst_8 = arith.constant 5.000000e-01 : f32
    %14 = vector.broadcast %cst_8 : f32 to vector<16x64xf32>
    %15 = arith.mulf %14, %5 : vector<16x64xf32>
    %16 = math.tanh %13 : vector<16x64xf32>
    %cst_9 = arith.constant 1.000000e+00 : f32
    %17 = vector.broadcast %cst_9 : f32 to vector<16x64xf32>
    %18 = arith.addf %17, %16 : vector<16x64xf32>
    %19 = arith.mulf %15, %18 : vector<16x64xf32>
    %c0_10 = arith.constant 0 : index
    %c0_11 = arith.constant 0 : index
    %20 = vector.load %arg4[%c0_10, %c0_11] : memref<64x32xf32, #tpu.memory_space<vmem>>, vector<64x32xf32>
    %cst_12 = arith.constant dense<0.000000e+00> : vector<16x32xf32>
    %21 = tpu.matmul %19, %20, %cst_12 {dimension_numbers = #tpu.dot_dimension_numbers<[1], [0], [0], [1], [0, 0, 1, 1], [], []>} : vector<16x64xf32>, vector<64x32xf32>, vector<16x32xf32> -> vector<16x32xf32>
    %c0_13 = arith.constant 0 : index
    %c0_14 = arith.constant 0 : index
    %22 = vector.load %arg5[%c0_13, %c0_14] : memref<1x32xf32, #tpu.memory_space<vmem>>, vector<1x32xf32>
    %23 = vector.broadcast %22 : vector<1x32xf32> to vector<16x32xf32>
    %24 = arith.addf %21, %23 : vector<16x32xf32>
    %c0_15 = arith.constant 0 : index
    %c0_16 = arith.constant 0 : index
    %25 = vector.load %arg6[%c0_15, %c0_16] : memref<16x32xf32, #tpu.memory_space<vmem>>, vector<16x32xf32>
    tpu.vector_store %arg6[%c0_15, %c0_16], %24 {strides = array<i32>} : memref<16x32xf32, #tpu.memory_space<vmem>>, vector<16x32xf32>,
    return
  }
  func.func @transform_0(%arg0: i32) -> (i32, i32) {
    %c0_i32 = arith.constant 0 : i32
    %c0_i32_0 = arith.constant 0 : i32
    return %arg0, %c0_i32 : i32, i32
  }
  func.func @transform_1(%arg0: i32) -> (i32, i32) {
    %c0_i32 = arith.constant 0 : i32
    %c0_i32_0 = arith.constant 0 : i32
    %c0_i32_1 = arith.constant 0 : i32
    return %c0_i32, %c0_i32_0 : i32, i32
  }
  func.func @transform_2(%arg0: i32) -> (i32, i32) {
    %c0_i32 = arith.constant 0 : i32
    %c0_i32_0 = arith.constant 0 : i32
    %c0_i32_1 = arith.constant 0 : i32
    return %c0_i32, %c0_i32_0 : i32, i32
  }
  func.func @transform_3(%arg0: i32) -> (i32, i32) {
    %c0_i32 = arith.constant 0 : i32
    %c0_i32_0 = arith.constant 0 : i32
    %c0_i32_1 = arith.constant 0 : i32
    return %c0_i32, %c0_i32_0 : i32, i32
  }
  func.func @transform_4(%arg0: i32) -> (i32, i32) {
    %c0_i32 = arith.constant 0 : i32
    %c0_i32_0 = arith.constant 0 : i32
    %c0_i32_1 = arith.constant 0 : i32
    return %c0_i32, %c0_i32_0 : i32, i32
  }
  func.func @transform_5(%arg0: i32) -> (i32, i32) {
    %c0_i32 = arith.constant 0 : i32
    %c0_i32_0 = arith.constant 0 : i32
    return %arg0, %c0_i32 : i32, i32
  }
}

module attributes {stable_mosaic.version = 11 : i64} {
  func.func @_mlp_kernel_resident(%arg0: i32, %arg1: memref<16x32xf32, #tpu.memory_space<vmem>>, %arg2: memref<32x64xf32, #tpu.memory_space<vmem>>, %arg3: memref<1x64xf32, #tpu.memory_space<vmem>>, %arg4: memref<64x32xf32, #tpu.memory_space<vmem>>, %arg5: memref<1x32xf32, #tpu.memory_space<vmem>>, %arg6: memref<16x32xf32, #tpu.memory_space<vmem>>) attributes {dimension_semantics = [#tpu.dimension_semantics<parallel>], iteration_bounds = array<i64: 2>, scalar_prefetch = 0 : i64, scratch_operands = 0 : i64, tpu.core_type = #tpu.core_type<tc>, window_params = [{transform_indices = @transform_0, window_bounds = array<i64: 16, 32>}, {pipeline_mode = #tpu.pipeline_mode<synchronous>, transform_indices = @transform_1, window_bounds = array<i64: 32, 64>}, {pipeline_mode = #tpu.pipeline_mode<synchronous>, transform_indices = @transform_2, window_bounds = array<i64: 1, 64>}, {pipeline_mode = #tpu.pipeline_mode<synchronous>, transform_indices = @transform_3, window_bounds = array<i64: 64, 32>}, {pipeline_mode = #tpu.pipeline_mode<synchronous>, transform_indices = @transform_4, window_bounds = array<i64: 1, 32>}, {transform_indices = @transform_5, window_bounds = array<i64: 16, 32>}]} {
    %c0 = arith.constant 0 : index
    %c0_0 = arith.constant 0 : index
    %0 = vector.load %arg1[%c0, %c0_0] : memref<16x32xf32, #tpu.memory_space<vmem>>, vector<16x32xf32>
    %c0_1 = arith.constant 0 : index
    %c0_2 = arith.constant 0 : index
    %1 = vector.load %arg2[%c0_1, %c0_2] : memref<32x64xf32, #tpu.memory_space<vmem>>, vector<32x64xf32>
    %cst = arith.constant dense<0.000000e+00> : vector<16x64xf32>
    %2 = tpu.matmul %0, %1, %cst {dimension_numbers = #tpu.dot_dimension_numbers<[1], [0], [0], [1], [0, 0, 1, 1], [], []>} : vector<16x32xf32>, vector<32x64xf32>, vector<16x64xf32> -> vector<16x64xf32>
    %c0_3 = arith.constant 0 : index
    %c0_4 = arith.constant 0 : index
    %3 = vector.load %arg3[%c0_3, %c0_4] : memref<1x64xf32, #tpu.memory_space<vmem>>, vector<1x64xf32>
    %4 = vector.broadcast %3 : vector<1x64xf32> to vector<16x64xf32>
    %5 = arith.addf %2, %4 : vector<16x64xf32>
    %6 = arith.mulf %5, %5 : vector<16x64xf32>
    %cst_5 = arith.constant 0.797884583 : f32
    %7 = vector.broadcast %cst_5 : f32 to vector<16x64xf32>
    %8 = arith.mulf %7, %5 : vector<16x64xf32>
    %cst_6 = arith.constant 4.471500e-02 : f32
    %9 = vector.broadcast %cst_6 : f32 to vector<16x64xf32>
    %10 = arith.mulf %9, %6 : vector<16x64xf32>
    %cst_7 = arith.constant 1.000000e+00 : f32
    %11 = vector.broadcast %cst_7 : f32 to vector<16x64xf32>
    %12 = arith.addf %11, %10 : vector<16x64xf32>
    %13 = arith.mulf %8, %12 : vector<16x64xf32>
    %cst_8 = arith.constant 5.000000e-01 : f32
    %14 = vector.broadcast %cst_8 : f32 to vector<16x64xf32>
    %15 = arith.mulf %14, %5 : vector<16x64xf32>
    %16 = math.tanh %13 : vector<16x64xf32>
    %cst_9 = arith.constant 1.000000e+00 : f32
    %17 = vector.broadcast %cst_9 : f32 to vector<16x64xf32>
    %18 = arith.addf %17, %16 : vector<16x64xf32>
    %19 = arith.mulf %15, %18 : vector<16x64xf32>
    %c0_10 = arith.constant 0 : index
    %c0_11 = arith.constant 0 : index
    %20 = vector.load %arg4[%c0_10, %c0_11] : memref<64x32xf32, #tpu.memory_space<vmem>>, vector<64x32xf32>
    %cst_12 = arith.constant dense<0.000000e+00> : vector<16x32xf32>
    %21 = tpu.matmul %19, %20, %cst_12 {dimension_numbers = #tpu.dot_dimension_numbers<[1], [0], [0], [1], [0, 0, 1, 1], [], []>} : vector<16x64xf32>, vector<64x32xf32>, vector<16x32xf32> -> vector<16x32xf32>
    %c0_13 = arith.constant 0 : index
    %c0_14 = arith.constant 0 : index
    %22 = vector.load %arg5[%c0_13, %c0_14] : memref<1x32xf32, #tpu.memory_space<vmem>>, vector<1x32xf32>
    %23 = vector.broadcast %22 : vector<1x32xf32> to vector<16x32xf32>
    %24 = arith.addf %21, %23 : vector<16x32xf32>
    %c0_15 = arith.constant 0 : index
    %c0_16 = arith.constant 0 : index
    %25 = vector.load %arg6[%c0_15, %c0_16] : memref<16x32xf32, #tpu.memory_space<vmem>>, vector<16x32xf32>
    tpu.vector_store %arg6[%c0_15, %c0_16], %24 {strides = array<i32>} : memref<16x32xf32, #tpu.memory_space<vmem>>, vector<16x32xf32>,
    return
  }
  func.func @transform_0(%arg0: i32) -> (i32, i32) {
    %c0_i32 = arith.constant 0 : i32
    %c0_i32_0 = arith.constant 0 : i32
    return %arg0, %c0_i32 : i32, i32
  }
  func.func @transform_1(%arg0: i32) -> (i32, i32) {
    %c0_i32 = arith.constant 0 : i32
    %c0_i32_0 = arith.constant 0 : i32
    %c0_i32_1 = arith.constant 0 : i32
    return %c0_i32, %c0_i32_0 : i32, i32
  }
  func.func @transform_2(%arg0: i32) -> (i32, i32) {
    %c0_i32 = arith.constant 0 : i32
    %c0_i32_0 = arith.constant 0 : i32
    %c0_i32_1 = arith.constant 0 : i32
    return %c0_i32, %c0_i32_0 : i32, i32
  }
  func.func @transform_3(%arg0: i32) -> (i32, i32) {
    %c0_i32 = arith.constant 0 : i32
    %c0_i32_0 = arith.constant 0 : i32
    %c0_i32_1 = arith.constant 0 : i32
    return %c0_i32, %c0_i32_0 : i32, i32
  }
  func.func @transform_4(%arg0: i32) -> (i32, i32) {
    %c0_i32 = arith.constant 0 : i32
    %c0_i32_0 = arith.constant 0 : i32
    %c0_i32_1 = arith.constant 0 : i32
    return %c0_i32, %c0_i32_0 : i32, i32
  }
  func.func @transform_5(%arg0: i32) -> (i32, i32) {
    %c0_i32 = arith.constant 0 : i32
    %c0_i32_0 = arith.constant 0 : i32
    return %arg0, %c0_i32 : i32, i32
  }
}

</mosaic_0001>

<llo_original>
// kernel: tpu_custom_call.1
$region0: #{tpu_custom_call.1}
  #allocation0 [shape = 'u32[]', space=smem, size = 0x4, offset = 0x4, fixed_abs, tag = 'smem constant byte address 0x4 - core index']
  #allocation1 [shape = 'u32[144,128]{1,0:T(1,128)}', space=vmem, size = 0x12000, scoped, tag = 'internal scratch']
  %s0 = inlined_call_operand.vmem [shape: f32[32,32], index: 0, kind: input, shape index: {}]
  %s1 = inlined_call_operand.vmem [shape: f32[32,64], index: 1, kind: input, shape index: {}]
  %s2 = inlined_call_operand.vmem [shape: f32[1,64], index: 2, kind: input, shape index: {}]
  %s3 = inlined_call_operand.vmem [shape: f32[64,32], index: 3, kind: input, shape index: {}]
  %s4 = inlined_call_operand.vmem [shape: f32[1,32], index: 4, kind: input, shape index: {}]
  %s5 = inlined_call_operand.hbm [shape: f32[32,32], index: 5, kind: output, shape index: {}]
  %s6 = sld [smem:[#allocation0]]
  $region53: #{tpu_custom_call.1} parent=0
    _
  %s8 = ssub.s32 1, %s6
  %s9 = scalar_select 0, %s8, %s6
  $region1: #{tpu_custom_call.1} parent=0
    #allocation2 [shape = 'u8[16384]{0}', space=vmem, size = 0x4000, scoped, tag = 'output window, operand 0']
    #allocation3 [shape = 's32[2]{0}', space=sflag, size = 0x8, scoped, tag = 'scoped memory for tpu_custom_call.1']
    %10 = vsyncpa [#allocation3], 0
    %s11 = scalar_lea.sflag [#allocation3], 1
    %12 = vsyncpa %s11, 0
    loop: start=0, step=1, limit=4
    $region2: #{tpu_custom_call.1} parent=1 // loop_pre_header
      _
    $region3: #{tpu_custom_call.1} parent=1 // loop_header
      %s14 = sphi 0, %s18
      %p15 = scmp.ge.s32.totalorder %s14, 4
      %s24 = sphi 0, %s26
      %s27 = sphi 0, %s24
      %s28 = sphi 0, %s27
      %s44 = sphi 0, %s28
      %s48 = sphi 0, %s48
      %s50 = sphi 0, %s48
      %s51 = sphi 0, %s50
      %s65 = sphi 0, %s51
      %s69 = sphi 0, %s69
      %s71 = sphi 0, %s69
      %s72 = sphi 0, %s71
      %s86 = sphi 0, %s72
      %s90 = sphi 0, %s90
      %s92 = sphi 0, %s90
      %s93 = sphi 0, %s92
      %s107 = sphi 0, %s93
      %s111 = sphi 0, %s111
      %s113 = sphi 0, %s111
      %s114 = sphi 0, %s113
      %s128 = sphi 0, %s114
      %s134 = sphi 0, %s136
      %s137 = sphi 0, %s134
      %s138 = sphi 0, %s137
      %s154 = sphi 0, %s138
    $region4: #{tpu_custom_call.1} parent=1 // loop_header_branch
      %17 = sbr.rel (%p15) target = $region8
    $region5: #{tpu_custom_call.1} parent=1 // loop_body
      %s19 = ssub.s32 %s14, 1
      %s20 = ssub.s32 %s14, 2
      %s21 = sadd.s32 %s14, 1
      %s22 = ssub.s32 %s14, %s21
      %p23 = scmp.eq.s32.totalorder %s22, 0
      %s25 = sadd.s32 %s24, 1
      %s26 = scalar_select %p23, %s24, %s25
      %p29 = pneg %p23
      %p30 = scmp.eq.s32.totalorder %s14, 1
      %p31 = por %p29, %p30
      %p32 = scmp.ne.s32.totalorder %s24, %s27
      %p33 = scmp.eq.s32.totalorder %s14, 0
      %p34 = por %p32, %p33
      %p35 = scmp.ne.s32.totalorder %s24, %s27
      %p36 = scmp.eq.s32.totalorder %s19, 1
      %p37 = por %p35, %p36
      %p38 = scmp.ne.s32.totalorder %s27, %s28
      %p39 = scmp.eq.s32.totalorder %s19, 0
      %p40 = por %p38, %p39
      %p41 = scmp.ne.s32.totalorder %s27, %s28
      %p42 = scmp.eq.s32.totalorder %s20, 1
      %p43 = por %p41, %p42
      %p45 = scmp.ne.s32.totalorder %s28, %s44
      %p46 = scmp.eq.s32.totalorder %s20, 0
      %p47 = por %p45, %p46
      %s49 = sadd.s32 %s48, 1
      %p52 = scmp.eq.s32.totalorder %s14, 1
      %p53 = scmp.ne.s32.totalorder %s48, %s50
      %p54 = scmp.eq.s32.totalorder %s14, 0
      %p55 = por %p53, %p54
      %p56 = scmp.ne.s32.totalorder %s48, %s50
      %p57 = scmp.eq.s32.totalorder %s19, 1
      %p58 = por %p56, %p57
      %p59 = scmp.ne.s32.totalorder %s50, %s51
      %p60 = scmp.eq.s32.totalorder %s19, 0
      %p61 = por %p59, %p60
      %p62 = scmp.ne.s32.totalorder %s50, %s51
      %p63 = scmp.eq.s32.totalorder %s20, 1
      %p64 = por %p62, %p63
      %p66 = scmp.ne.s32.totalorder %s51, %s65
      %p67 = scmp.eq.s32.totalorder %s20, 0
      %p68 = por %p66, %p67
      %s70 = sadd.s32 %s69, 1
      %p73 = scmp.eq.s32.totalorder %s14, 1
      %p74 = scmp.ne.s32.totalorder %s69, %s71
      %p75 = scmp.eq.s32.totalorder %s14, 0
      %p76 = por %p74, %p75
      %p77 = scmp.ne.s32.totalorder %s69, %s71
      %p78 = scmp.eq.s32.totalorder %s19, 1
      %p79 = por %p77, %p78
      %p80 = scmp.ne.s32.totalorder %s71, %s72
      %p81 = scmp.eq.s32.totalorder %s19, 0
      %p82 = por %p80, %p81
      %p83 = scmp.ne.s32.totalorder %s71, %s72
      %p84 = scmp.eq.s32.totalorder %s20, 1
      %p85 = por %p83, %p84
      %p87 = scmp.ne.s32.totalorder %s72, %s86
      %p88 = scmp.eq.s32.totalorder %s20, 0
      %p89 = por %p87, %p88
      %s91 = sadd.s32 %s90, 1
      %p94 = scmp.eq.s32.totalorder %s14, 1
      %p95 = scmp.ne.s32.totalorder %s90, %s92
      %p96 = scmp.eq.s32.totalorder %s14, 0
      %p97 = por %p95, %p96
      %p98 = scmp.ne.s32.totalorder %s90, %s92
      %p99 = scmp.eq.s32.totalorder %s19, 1
      %p100 = por %p98, %p99
      %p101 = scmp.ne.s32.totalorder %s92, %s93
      %p102 = scmp.eq.s32.totalorder %s19, 0
      %p103 = por %p101, %p102
      %p104 = scmp.ne.s32.totalorder %s92, %s93
      %p105 = scmp.eq.s32.totalorder %s20, 1
      %p106 = por %p104, %p105
      %p108 = scmp.ne.s32.totalorder %s93, %s107
      %p109 = scmp.eq.s32.totalorder %s20, 0
      %p110 = por %p108, %p109
      %s112 = sadd.s32 %s111, 1
      %p115 = scmp.eq.s32.totalorder %s14, 1
      %p116 = scmp.ne.s32.totalorder %s111, %s113
      %p117 = scmp.eq.s32.totalorder %s14, 0
      %p118 = por %p116, %p117
      %p119 = scmp.ne.s32.totalorder %s111, %s113
      %p120 = scmp.eq.s32.totalorder %s19, 1
      %p121 = por %p119, %p120
      %p122 = scmp.ne.s32.totalorder %s113, %s114
      %p123 = scmp.eq.s32.totalorder %s19, 0
      %p124 = por %p122, %p123
      %p125 = scmp.ne.s32.totalorder %s113, %s114
      %p126 = scmp.eq.s32.totalorder %s20, 1
      %p127 = por %p125, %p126
      %p129 = scmp.ne.s32.totalorder %s114, %s128
      %p130 = scmp.eq.s32.totalorder %s20, 0
      %p131 = por %p129, %p130
      %s132 = ssub.s32 %s14, %s21
      %p133 = scmp.eq.s32.totalorder %s132, 0
      %s135 = sadd.s32 %s134, 1
      %s136 = scalar_select %p133, %s134, %s135
      %p139 = pneg %p133
      %p140 = scmp.eq.s32.totalorder %s14, 1
      %p141 = por %p139, %p140
      %p142 = scmp.ne.s32.totalorder %s134, %s137
      %p143 = scmp.eq.s32.totalorder %s14, 0
      %p144 = por %p142, %p143
      %p145 = scmp.ne.s32.totalorder %s134, %s137
      %p146 = scmp.eq.s32.totalorder %s19, 1
      %p147 = por %p145, %p146
      %p148 = scmp.ne.s32.totalorder %s137, %s138
      %p149 = scmp.eq.s32.totalorder %s19, 0
      %p150 = por %p148, %p149
      %p151 = scmp.ne.s32.totalorder %s137, %s138
      %p152 = scmp.eq.s32.totalorder %s20, 1
      %p153 = por %p151, %p152
      %p155 = scmp.ne.s32.totalorder %s138, %s154
      %p156 = scmp.eq.s32.totalorder %s20, 0
      %p157 = por %p155, %p156
      %p158 = scmp.le.s32.totalorder 1, %s14
      %p159 = scmp.lt.s32.totalorder %s14, 3
      %p160 = pnand %p158, %p159
      %p161 = pneg %p160
      // Predicated region
      $region9: #{tpu_custom_call.1} parent=5 // pred_check
        _
      $region10: #{tpu_custom_call.1} parent=5 // pred_check_branch
        %163 = sbr.rel (%p160) target = $region12
      $region11: #{tpu_custom_call.1} parent=5 // pred_region
        %s164 = ssub.s32 %s14, 1
        // Predicated region
        $region13: #{tpu_custom_call.1} parent=11 // pred_check
          %p165 = pneg %p61
        $region14: #{tpu_custom_call.1} parent=11 // pred_check_branch
          %167 = sbr.rel (%p165) target = $region16
        $region15: #{tpu_custom_call.1} parent=11 // pred_region
          _
        $region16: #{tpu_custom_call.1} parent=11 // pred_fallthru
          _
        // Predicated region
        $region17: #{tpu_custom_call.1} parent=11 // pred_check
          %p168 = pneg %p82
        $region18: #{tpu_custom_call.1} parent=11 // pred_check_branch
          %170 = sbr.rel (%p168) target = $region20
        $region19: #{tpu_custom_call.1} parent=11 // pred_region
          _
        $region20: #{tpu_custom_call.1} parent=11 // pred_fallthru
          _
        // Predicated region
        $region21: #{tpu_custom_call.1} parent=11 // pred_check
          %p171 = pneg %p103
        $region22: #{tpu_custom_call.1} parent=11 // pred_check_branch
          %173 = sbr.rel (%p171) target = $region24
        $region23: #{tpu_custom_call.1} parent=11 // pred_region
          _
        $region24: #{tpu_custom_call.1} parent=11 // pred_fallthru
          _
        // Predicated region
        $region25: #{tpu_custom_call.1} parent=11 // pred_check
          %p174 = pneg %p124
        $region26: #{tpu_custom_call.1} parent=11 // pred_check_branch
          %176 = sbr.rel (%p174) target = $region28
        $region27: #{tpu_custom_call.1} parent=11 // pred_region
          _
        $region28: #{tpu_custom_call.1} parent=11 // pred_fallthru
          _
      $region12: #{tpu_custom_call.1} parent=5 // pred_fallthru
        _
      %p177 = scmp.lt.s32.totalorder %s14, 2
      // Predicated region
      $region29: #{tpu_custom_call.1} parent=5 // pred_check
        %p178 = pneg %p177
      $region30: #{tpu_custom_call.1} parent=5 // pred_check_branch
        %180 = sbr.rel (%p178) target = $region32
      $region31: #{tpu_custom_call.1} parent=5 // pred_region
        // Predicated region
        $region33: #{tpu_custom_call.1} parent=31 // pred_check
          %p181 = pneg %p34
        $region34: #{tpu_custom_call.1} parent=31 // pred_check_branch
          %183 = sbr.rel (%p181) target = $region36
        $region35: #{tpu_custom_call.1} parent=31 // pred_region
          %s184 = smul.u32 2, %s14
          %p185 = scmp.lt.s32.totalorder %s184, 3
          %s186 = scalar_select %p185, %s184, 3
          %s187 = smul.addr %s186, 8
          %s188 = scalar_lea.vmem %s0, %s187
          %s189 = smul.u32 2, %s14
        $region36: #{tpu_custom_call.1} parent=31 // pred_fallthru
          _
      $region32: #{tpu_custom_call.1} parent=5 // pred_fallthru
        _
      %p190 = scmp.le.s32.totalorder 1, %s14
      %p191 = scmp.lt.s32.totalorder %s14, 3
      %p192 = pnand %p190, %p191
      %p193 = pneg %p192
      // Predicated region
      $region37: #{tpu_custom_call.1} parent=5 // pred_check
        _
      $region38: #{tpu_custom_call.1} parent=5 // pred_check_branch
        %195 = sbr.rel (%p192) target = $region40
      $region39: #{tpu_custom_call.1} parent=5 // pred_region
        %s196 = ssub.s32 %s14, 1
        %s197 = smul.u32 2, %s19
        %p198 = scmp.lt.s32.totalorder %s197, 3
        %s199 = scalar_select %p198, %s197, 3
        %s200 = smul.addr %s199, 8
        %s201 = scalar_lea.vmem %s0, %s200
        %p202 = pneg %p40
        %p203 = pneg %p37
        %p204 = pneg %p61
        %p205 = pneg %p58
        %p206 = pneg %p82
        %p207 = pneg %p79
        %p208 = pneg %p103
        %p209 = pneg %p100
        %p210 = pneg %p124
        %p211 = pneg %p121
        %p212 = pneg %p150
        %p213 = pneg %p147
        %s214 = sand.u32 %s137, 1
        %s215 = scalar_lea.sflag [#allocation3], %s214
        %s216 = sand.u32 %s137, 1
        %s217 = smul.addr %s216, 16
        %s218 = scalar_lea.vmem [#allocation2], %s217
        %s219 = smul.u32 2, %s19
        %p220 = scmp.lt.s32.totalorder %s219, 3
        %s221 = scalar_select %p220, %s219, 3
        %s222 = smul.addr %s221, 8
        %s223 = scalar_lea.vmem %s0, %s222
        %s224 = smul.u32 2, %s19
        %s225 = smul.u32 2, %s19
        %v226 = vld [vmem:[%s223] sm:$0xff]
        %v227 = vld [vmem:[%s223 + $0x8] sm:$0xff]
        %v228 = vld [vmem:[%s1] sm:$0xff]
        %v229 = vld [vmem:[%s1 + $0x8] sm:$0xff]
        %v230 = vld [vmem:[%s1 + $0x10] sm:$0xff]
        %v231 = vld [vmem:[%s1 + $0x18] sm:$0xff]
        %v232 = vld [vmem:[%s2] sm:$0x1]
        %v234 = vlaneseq
        %v235 = vshrl.u32 %v234, 7
        %v236 = vsub.s32 0, %v235
        %v237 = vrot.slane %v232, %v236
        %vm239 = vcmask 261120
        %v241 = vsel %vm239, %v226, 0
        %v244 = vsel %vm239, %v227, 0
        %246 = vmatprep.subr.mxu0 0.0
        %247 = vmatpush1.msra.mxu0 %v228
        %248 = vmatprep.subr.mxu0 0.0
        %249 = vmatpush1.msra.mxu0 %v229
        %250 = vmatprep.subr.mxu0 0.0
        %251 = vmatpush1.msra.mxu0 %v230
        %252 = vmatprep.subr.mxu0 0.0
        %253 = vmatpush1.msra.mxu0 %v231
        %254 = vmatprep.subr.mxu0 0.0
        %255 = vmatpush1.msra.mxu0 0.0
        %256 = vmatprep.subr.mxu0 0.0
        %257 = vmatpush1.msra.mxu0 0.0
        %258 = vmatprep.subr.mxu0 0.0
        %259 = vmatpush1.msra.mxu0 0.0
        %260 = vmatprep.subr.mxu0 0.0
        %261 = vmatpush1.msra.mxu0 0.0
        %262 = vmatprep.subr.mxu0 0.0
        %263 = vmatpush1.msra.mxu0 0.0
        %264 = vmatprep.subr.mxu0 0.0
        %265 = vmatpush1.msra.mxu0 0.0
        %266 = vmatprep.subr.mxu0 0.0
        %267 = vmatpush1.msra.mxu0 0.0
        %268 = vmatprep.subr.mxu0 0.0
        %269 = vmatpush1.msra.mxu0 0.0
        %270 = vmatprep.subr.mxu0 0.0
        %271 = vmatpush1.msra.mxu0 0.0
        %272 = vmatprep.subr.mxu0 0.0
        %273 = vmatpush1.msra.mxu0 0.0
        %274 = vmatprep.subr.mxu0 0.0
        %275 = vmatpush1.msra.mxu0 0.0
        %276 = vmatprep.subr.mxu0 0.0
        %277 = vmatpush1.msra.mxu0 0.0
        %278 = vmatprep.subr.mxu0 0.0
        %279 = vmatpush1.msra.mxu0 0.0
        %280 = vmatprep.subr.mxu0 0.0
        %281 = vmatpush1.msra.mxu0 0.0
        %282 = vmatprep.subr.mxu0 0.0
        %283 = vmatpush1.msra.mxu0 0.0
        %284 = vmatprep.subr.mxu0 0.0
        %285 = vmatpush1.msra.mxu0 0.0
        %286 = vmatprep.subr.mxu0 0.0
        %287 = vmatpush1.msra.mxu0 0.0
        %288 = vmatprep.subr.mxu0 0.0
        %289 = vmatpush1.msra.mxu0 0.0
        %290 = vmatprep.subr.mxu0 0.0
        %291 = vmatpush1.msra.mxu0 0.0
        %292 = vmatprep.subr.mxu0 0.0
        %293 = vmatpush1.msra.mxu0 0.0
        %294 = vmatprep.subr.mxu0 0.0
        %295 = vmatpush1.msra.mxu0 0.0
        %296 = vmatprep.subr.mxu0 0.0
        %297 = vmatpush1.msra.mxu0 0.0
        %298 = vmatprep.subr.mxu0 0.0
        %299 = vmatpush1.msra.mxu0 0.0
        %300 = vmatprep.subr.mxu0 0.0
        %301 = vmatpush1.msra.mxu0 0.0
        %302 = vmatprep.subr.mxu0 0.0
        %303 = vmatpush1.msra.mxu0 0.0
        %304 = vmatprep.subr.mxu0 0.0
        %305 = vmatpush1.msra.mxu0 0.0
        %306 = vmatprep.subr.mxu0 0.0
        %307 = vmatpush1.msra.mxu0 0.0
        %308 = vmatprep.subr.mxu0 0.0
        %309 = vmatpush1.msra.mxu0 0.0
        %310 = vmatprep.mubr.f32.mxu0 0.0
        %311 = vmatmul.mubr.f32.gmra.mrb[0].mxu0 %v241
        %v312 = vpop.f32.mrb[0].mxu0
        %v313 = vadd.f32 %v237, %v312
        %v314 = vpop.f32.mrb[0].mxu0
        %315 = vmatprep.mubr.f32.mxu0 0.0
        %316 = vmatmul.mubr.f32.gmra.mrb[0].mxu0 %v244
        %v317 = vpop.f32.mrb[0].mxu0
        %v318 = vadd.f32 %v237, %v317
        %v319 = vpop.f32.mrb[0].mxu0
        %320 = vdwg.mxu0
        %v321 = vmul.f32 %v313, %v313
        %v322 = vmul.f32 %v318, %v318
        %v323 = vmul.f32 %v313, 0.7978846
        %v324 = vmul.f32 %v318, 0.7978846
        %v325 = vmul.f32 %v321, 0.044715
        %v326 = vmul.f32 %v322, 0.044715
        %v327 = vadd.f32 %v325, 1.0
        %v328 = vadd.f32 %v326, 1.0
        %v329 = vmul.f32 %v323, %v327
        %v330 = vmul.f32 %v324, %v328
        %v331 = vmul.f32 %v313, 0.5
        %v332 = vmul.f32 %v318, 0.5
        %v333 = vtanh.pop %v329
        %v334 = vtanh.pop %v330
        %v335 = vadd.f32 %v333, 1.0
        %v336 = vadd.f32 %v334, 1.0
        %v337 = vmul.f32 %v331, %v335
        %v338 = vmul.f32 %v332, %v336
        %v339 = vld [vmem:[%s3] sm:$0xff]
        %v340 = vld [vmem:[%s3 + $0x8] sm:$0xff]
        %v341 = vld [vmem:[%s3 + $0x10] sm:$0xff]
        %v342 = vld [vmem:[%s3 + $0x18] sm:$0xff]
        %v343 = vld [vmem:[%s3 + $0x20] sm:$0xff]
        %v344 = vld [vmem:[%s3 + $0x28] sm:$0xff]
        %v345 = vld [vmem:[%s3 + $0x30] sm:$0xff]
        %v346 = vld [vmem:[%s3 + $0x38] sm:$0xff]
        %v347 = vld [vmem:[%s4] sm:$0x1]
        %v349 = vlaneseq
        %v350 = vshrl.u32 %v349, 7
        %v351 = vsub.s32 0, %v350
        %v352 = vrot.slane %v347, %v351
        %vm354 = vcmask 523264
        %v356 = vsel %vm354, %v337, 0
        %v359 = vsel %vm354, %v338, 0
        %361 = vmatprep.subr.mxu0 0.0
        %362 = vmatpush1.msra.mxu0 %v339
        %363 = vmatprep.subr.mxu0 0.0
        %364 = vmatpush1.msra.mxu0 %v340
        %365 = vmatprep.subr.mxu0 0.0
        %366 = vmatpush1.msra.mxu0 %v341
        %367 = vmatprep.subr.mxu0 0.0
        %368 = vmatpush1.msra.mxu0 %v342
        %369 = vmatprep.subr.mxu0 0.0
        %370 = vmatpush1.msra.mxu0 %v343
        %371 = vmatprep.subr.mxu0 0.0
        %372 = vmatpush1.msra.mxu0 %v344
        %373 = vmatprep.subr.mxu0 0.0
        %374 = vmatpush1.msra.mxu0 %v345
        %375 = vmatprep.subr.mxu0 0.0
        %376 = vmatpush1.msra.mxu0 %v346
        %377 = vmatprep.subr.mxu0 0.0
        %378 = vmatpush1.msra.mxu0 0.0
        %379 = vmatprep.subr.mxu0 0.0
        %380 = vmatpush1.msra.mxu0 0.0
        %381 = vmatprep.subr.mxu0 0.0
        %382 = vmatpush1.msra.mxu0 0.0
        %383 = vmatprep.subr.mxu0 0.0
        %384 = vmatpush1.msra.mxu0 0.0
        %385 = vmatprep.subr.mxu0 0.0
        %386 = vmatpush1.msra.mxu0 0.0
        %387 = vmatprep.subr.mxu0 0.0
        %388 = vmatpush1.msra.mxu0 0.0
        %389 = vmatprep.subr.mxu0 0.0
        %390 = vmatpush1.msra.mxu0 0.0
        %391 = vmatprep.subr.mxu0 0.0
        %392 = vmatpush1.msra.mxu0 0.0
        %393 = vmatprep.subr.mxu0 0.0
        %394 = vmatpush1.msra.mxu0 0.0
        %395 = vmatprep.subr.mxu0 0.0
        %396 = vmatpush1.msra.mxu0 0.0
        %397 = vmatprep.subr.mxu0 0.0
        %398 = vmatpush1.msra.mxu0 0.0
        %399 = vmatprep.subr.mxu0 0.0
        %400 = vmatpush1.msra.mxu0 0.0
        %401 = vmatprep.subr.mxu0 0.0
        %402 = vmatpush1.msra.mxu0 0.0
        %403 = vmatprep.subr.mxu0 0.0
        %404 = vmatpush1.msra.mxu0 0.0
        %405 = vmatprep.subr.mxu0 0.0
        %406 = vmatpush1.msra.mxu0 0.0
        %407 = vmatprep.subr.mxu0 0.0
        %408 = vmatpush1.msra.mxu0 0.0
        %409 = vmatprep.subr.mxu0 0.0
        %410 = vmatpush1.msra.mxu0 0.0
        %411 = vmatprep.subr.mxu0 0.0
        %412 = vmatpush1.msra.mxu0 0.0
        %413 = vmatprep.subr.mxu0 0.0
        %414 = vmatpush1.msra.mxu0 0.0
        %415 = vmatprep.subr.mxu0 0.0
        %416 = vmatpush1.msra.mxu0 0.0
        %417 = vmatprep.subr.mxu0 0.0
        %418 = vmatpush1.msra.mxu0 0.0
        %419 = vmatprep.subr.mxu0 0.0
        %420 = vmatpush1.msra.mxu0 0.0
        %421 = vmatprep.subr.mxu0 0.0
        %422 = vmatpush1.msra.mxu0 0.0
        %423 = vmatprep.subr.mxu0 0.0
        %424 = vmatpush1.msra.mxu0 0.0
        %425 = vmatprep.mubr.f32.mxu0 0.0
        %426 = vmatmul.mubr.f32.gmra.mrb[0].mxu0 %v356
        %v427 = vpop.f32.mrb[0].mxu0
        %v428 = vadd.f32 %v352, %v427
        %v429 = vpop.f32.mrb[0].mxu0
        %430 = vmatprep.mubr.f32.mxu0 0.0
        %431 = vmatmul.mubr.f32.gmra.mrb[0].mxu0 %v359
        %v432 = vpop.f32.mrb[0].mxu0
        %v433 = vadd.f32 %v352, %v432
        %v434 = vpop.f32.mrb[0].mxu0
        %435 = vdwg.mxu0
        %436 = vst.msk [vmem:[%s218] sm:$0xff] %vm239, %v428
        %437 = vst.msk [vmem:[%s218 + $0x8] sm:$0xff] %vm239, %v433
        %s438 = sand.u32 %s137, 1
        %s439 = scalar_lea.sflag [#allocation3], %s438
        %s440 = sand.u32 %s137, 1
        %s441 = smul.addr %s440, 16
        %s442 = scalar_lea.vmem [#allocation2], %s441
        // Predicated region
        $region41: #{tpu_custom_call.1} parent=39 // pred_check
          %p443 = pneg %p147
        $region42: #{tpu_custom_call.1} parent=39 // pred_check_branch
          %445 = sbr.rel (%p443) target = $region44
        $region43: #{tpu_custom_call.1} parent=39 // pred_region
          %s446 = smul.u32 2, %s19
          %s448 = ssub.s32 256, 256
          %449 = vsyncadd %s439, %s448
          %s450 = smul.addr %s446, 128
          %s451 = scalar_lea.hbm %s5, %s450
          %s452 = sshll.u32 %s442, 4
          %s453 = int_to_ptr.vmem [resolvable:$true] %s452
          %458 = dma.vmem_to_hbm [thread:$0]  %s453, 256, %s451, %s439, 128, 128, 8
        $region44: #{tpu_custom_call.1} parent=39 // pred_fallthru
          _
      $region40: #{tpu_custom_call.1} parent=5 // pred_fallthru
        _
      %p459 = scmp.le.s32.totalorder 2, %s14
      // Predicated region
      $region45: #{tpu_custom_call.1} parent=5 // pred_check
        %p460 = pneg %p459
      $region46: #{tpu_custom_call.1} parent=5 // pred_check_branch
        %462 = sbr.rel (%p460) target = $region48
      $region47: #{tpu_custom_call.1} parent=5 // pred_region
        %s463 = ssub.s32 %s14, 2
        // Predicated region
        $region49: #{tpu_custom_call.1} parent=47 // pred_check
          %p464 = pneg %p153
        $region50: #{tpu_custom_call.1} parent=47 // pred_check_branch
          %466 = sbr.rel (%p464) target = $region52
        $region51: #{tpu_custom_call.1} parent=47 // pred_region
          %s467 = sand.u32 %s138, 1
          %s468 = scalar_lea.sflag [#allocation3], %s467
          %s469 = sand.u32 %s138, 1
          %s470 = smul.addr %s469, 16
          %s471 = scalar_lea.vmem [#allocation2], %s470
          %472 = dma.done %s468, 256
        $region52: #{tpu_custom_call.1} parent=47 // pred_fallthru
          _
      $region48: #{tpu_custom_call.1} parent=5 // pred_fallthru
        _
    $region6: #{tpu_custom_call.1} parent=1 // loop_footer
      %s18 = sadd.s32 1, %s14
    $region7: #{tpu_custom_call.1} parent=1 // loop_footer_branch
      %13 = sbr.rel target = $region3
    $region8: #{tpu_custom_call.1} parent=1 // loop_exit
      _
    %473 = vsyncpa [#allocation3], 1
    %s474 = scalar_lea.sflag [#allocation3], 1
    %475 = vsyncpa %s474, 1

// kernel: tpu_custom_call.1
$region0: #{tpu_custom_call.1}
  #allocation0 [shape = 'u32[]', space=smem, size = 0x4, offset = 0x4, fixed_abs, tag = 'smem constant byte address 0x4 - core index']
  #allocation1 [shape = 'u32[144,128]{1,0:T(1,128)}', space=vmem, size = 0x12000, scoped, tag = 'internal scratch']
  %s0 = inlined_call_operand.vmem [shape: f32[32,32], index: 0, kind: input, shape index: {}]
  %s1 = inlined_call_operand.vmem [shape: f32[32,64], index: 1, kind: input, shape index: {}]
  %s2 = inlined_call_operand.vmem [shape: f32[1,64], index: 2, kind: input, shape index: {}]
  %s3 = inlined_call_operand.vmem [shape: f32[64,32], index: 3, kind: input, shape index: {}]
  %s4 = inlined_call_operand.vmem [shape: f32[1,32], index: 4, kind: input, shape index: {}]
  %s5 = inlined_call_operand.hbm [shape: f32[32,32], index: 5, kind: output, shape index: {}]
  %s6 = sld [smem:[#allocation0]]
  $region53: #{tpu_custom_call.1} parent=0
    _
  %s8 = ssub.s32 1, %s6
  %s9 = scalar_select 0, %s8, %s6
  $region1: #{tpu_custom_call.1} parent=0
    #allocation2 [shape = 'u8[16384]{0}', space=vmem, size = 0x4000, scoped, tag = 'output window, operand 0']
    #allocation3 [shape = 's32[2]{0}', space=sflag, size = 0x8, scoped, tag = 'scoped memory for tpu_custom_call.1']
    %10 = vsyncpa [#allocation3], 0
    %s11 = scalar_lea.sflag [#allocation3], 1
    %12 = vsyncpa %s11, 0
    loop: start=0, step=1, limit=4
    $region2: #{tpu_custom_call.1} parent=1 // loop_pre_header
      _
    $region3: #{tpu_custom_call.1} parent=1 // loop_header
      %s14 = sphi 0, %s18
      %p15 = scmp.ge.s32.totalorder %s14, 4
      %s24 = sphi 0, %s26
      %s27 = sphi 0, %s24
      %s28 = sphi 0, %s27
      %s44 = sphi 0, %s28
      %s48 = sphi 0, %s48
      %s50 = sphi 0, %s48
      %s51 = sphi 0, %s50
      %s65 = sphi 0, %s51
      %s69 = sphi 0, %s69
      %s71 = sphi 0, %s69
      %s72 = sphi 0, %s71
      %s86 = sphi 0, %s72
      %s90 = sphi 0, %s90
      %s92 = sphi 0, %s90
      %s93 = sphi 0, %s92
      %s107 = sphi 0, %s93
      %s111 = sphi 0, %s111
      %s113 = sphi 0, %s111
      %s114 = sphi 0, %s113
      %s128 = sphi 0, %s114
      %s134 = sphi 0, %s136
      %s137 = sphi 0, %s134
      %s138 = sphi 0, %s137
      %s154 = sphi 0, %s138
    $region4: #{tpu_custom_call.1} parent=1 // loop_header_branch
      %17 = sbr.rel (%p15) target = $region8
    $region5: #{tpu_custom_call.1} parent=1 // loop_body
      %s19 = ssub.s32 %s14, 1
      %s20 = ssub.s32 %s14, 2
      %s21 = sadd.s32 %s14, 1
      %s22 = ssub.s32 %s14, %s21
      %p23 = scmp.eq.s32.totalorder %s22, 0
      %s25 = sadd.s32 %s24, 1
      %s26 = scalar_select %p23, %s24, %s25
      %p29 = pneg %p23
      %p30 = scmp.eq.s32.totalorder %s14, 1
      %p31 = por %p29, %p30
      %p32 = scmp.ne.s32.totalorder %s24, %s27
      %p33 = scmp.eq.s32.totalorder %s14, 0
      %p34 = por %p32, %p33
      %p35 = scmp.ne.s32.totalorder %s24, %s27
      %p36 = scmp.eq.s32.totalorder %s19, 1
      %p37 = por %p35, %p36
      %p38 = scmp.ne.s32.totalorder %s27, %s28
      %p39 = scmp.eq.s32.totalorder %s19, 0
      %p40 = por %p38, %p39
      %p41 = scmp.ne.s32.totalorder %s27, %s28
      %p42 = scmp.eq.s32.totalorder %s20, 1
      %p43 = por %p41, %p42
      %p45 = scmp.ne.s32.totalorder %s28, %s44
      %p46 = scmp.eq.s32.totalorder %s20, 0
      %p47 = por %p45, %p46
      %s49 = sadd.s32 %s48, 1
      %p52 = scmp.eq.s32.totalorder %s14, 1
      %p53 = scmp.ne.s32.totalorder %s48, %s50
      %p54 = scmp.eq.s32.totalorder %s14, 0
      %p55 = por %p53, %p54
      %p56 = scmp.ne.s32.totalorder %s48, %s50
      %p57 = scmp.eq.s32.totalorder %s19, 1
      %p58 = por %p56, %p57
      %p59 = scmp.ne.s32.totalorder %s50, %s51
      %p60 = scmp.eq.s32.totalorder %s19, 0
      %p61 = por %p59, %p60
      %p62 = scmp.ne.s32.totalorder %s50, %s51
      %p63 = scmp.eq.s32.totalorder %s20, 1
      %p64 = por %p62, %p63
      %p66 = scmp.ne.s32.totalorder %s51, %s65
      %p67 = scmp.eq.s32.totalorder %s20, 0
      %p68 = por %p66, %p67
      %s70 = sadd.s32 %s69, 1
      %p73 = scmp.eq.s32.totalorder %s14, 1
      %p74 = scmp.ne.s32.totalorder %s69, %s71
      %p75 = scmp.eq.s32.totalorder %s14, 0
      %p76 = por %p74, %p75
      %p77 = scmp.ne.s32.totalorder %s69, %s71
      %p78 = scmp.eq.s32.totalorder %s19, 1
      %p79 = por %p77, %p78
      %p80 = scmp.ne.s32.totalorder %s71, %s72
      %p81 = scmp.eq.s32.totalorder %s19, 0
      %p82 = por %p80, %p81
      %p83 = scmp.ne.s32.totalorder %s71, %s72
      %p84 = scmp.eq.s32.totalorder %s20, 1
      %p85 = por %p83, %p84
      %p87 = scmp.ne.s32.totalorder %s72, %s86
      %p88 = scmp.eq.s32.totalorder %s20, 0
      %p89 = por %p87, %p88
      %s91 = sadd.s32 %s90, 1
      %p94 = scmp.eq.s32.totalorder %s14, 1
      %p95 = scmp.ne.s32.totalorder %s90, %s92
      %p96 = scmp.eq.s32.totalorder %s14, 0
      %p97 = por %p95, %p96
      %p98 = scmp.ne.s32.totalorder %s90, %s92
      %p99 = scmp.eq.s32.totalorder %s19, 1
      %p100 = por %p98, %p99
      %p101 = scmp.ne.s32.totalorder %s92, %s93
      %p102 = scmp.eq.s32.totalorder %s19, 0
      %p103 = por %p101, %p102
      %p104 = scmp.ne.s32.totalorder %s92, %s93
      %p105 = scmp.eq.s32.totalorder %s20, 1
      %p106 = por %p104, %p105
      %p108 = scmp.ne.s32.totalorder %s93, %s107
      %p109 = scmp.eq.s32.totalorder %s20, 0
      %p110 = por %p108, %p109
      %s112 = sadd.s32 %s111, 1
      %p115 = scmp.eq.s32.totalorder %s14, 1
      %p116 = scmp.ne.s32.totalorder %s111, %s113
      %p117 = scmp.eq.s32.totalorder %s14, 0
      %p118 = por %p116, %p117
      %p119 = scmp.ne.s32.totalorder %s111, %s113
      %p120 = scmp.eq.s32.totalorder %s19, 1
      %p121 = por %p119, %p120
      %p122 = scmp.ne.s32.totalorder %s113, %s114
      %p123 = scmp.eq.s32.totalorder %s19, 0
      %p124 = por %p122, %p123
      %p125 = scmp.ne.s32.totalorder %s113, %s114
      %p126 = scmp.eq.s32.totalorder %s20, 1
      %p127 = por %p125, %p126
      %p129 = scmp.ne.s32.totalorder %s114, %s128
      %p130 = scmp.eq.s32.totalorder %s20, 0
      %p131 = por %p129, %p130
      %s132 = ssub.s32 %s14, %s21
      %p133 = scmp.eq.s32.totalorder %s132, 0
      %s135 = sadd.s32 %s134, 1
      %s136 = scalar_select %p133, %s134, %s135
      %p139 = pneg %p133
      %p140 = scmp.eq.s32.totalorder %s14, 1
      %p141 = por %p139, %p140
      %p142 = scmp.ne.s32.totalorder %s134, %s137
      %p143 = scmp.eq.s32.totalorder %s14, 0
      %p144 = por %p142, %p143
      %p145 = scmp.ne.s32.totalorder %s134, %s137
      %p146 = scmp.eq.s32.totalorder %s19, 1
      %p147 = por %p145, %p146
      %p148 = scmp.ne.s32.totalorder %s137, %s138
      %p149 = scmp.eq.s32.totalorder %s19, 0
      %p150 = por %p148, %p149
      %p151 = scmp.ne.s32.totalorder %s137, %s138
      %p152 = scmp.eq.s32.totalorder %s20, 1
      %p153 = por %p151, %p152
      %p155 = scmp.ne.s32.totalorder %s138, %s154
      %p156 = scmp.eq.s32.totalorder %s20, 0
      %p157 = por %p155, %p156
      %p158 = scmp.le.s32.totalorder 1, %s14
      %p159 = scmp.lt.s32.totalorder %s14, 3
      %p160 = pnand %p158, %p159
      %p161 = pneg %p160
      // Predicated region
      $region9: #{tpu_custom_call.1} parent=5 // pred_check
        _
      $region10: #{tpu_custom_call.1} parent=5 // pred_check_branch
        %163 = sbr.rel (%p160) target = $region12
      $region11: #{tpu_custom_call.1} parent=5 // pred_region
        %s164 = ssub.s32 %s14, 1
        // Predicated region
        $region13: #{tpu_custom_call.1} parent=11 // pred_check
          %p165 = pneg %p61
        $region14: #{tpu_custom_call.1} parent=11 // pred_check_branch
          %167 = sbr.rel (%p165) target = $region16
        $region15: #{tpu_custom_call.1} parent=11 // pred_region
          _
        $region16: #{tpu_custom_call.1} parent=11 // pred_fallthru
          _
        // Predicated region
        $region17: #{tpu_custom_call.1} parent=11 // pred_check
          %p168 = pneg %p82
        $region18: #{tpu_custom_call.1} parent=11 // pred_check_branch
          %170 = sbr.rel (%p168) target = $region20
        $region19: #{tpu_custom_call.1} parent=11 // pred_region
          _
        $region20: #{tpu_custom_call.1} parent=11 // pred_fallthru
          _
        // Predicated region
        $region21: #{tpu_custom_call.1} parent=11 // pred_check
          %p171 = pneg %p103
        $region22: #{tpu_custom_call.1} parent=11 // pred_check_branch
          %173 = sbr.rel (%p171) target = $region24
        $region23: #{tpu_custom_call.1} parent=11 // pred_region
          _
        $region24: #{tpu_custom_call.1} parent=11 // pred_fallthru
          _
        // Predicated region
        $region25: #{tpu_custom_call.1} parent=11 // pred_check
          %p174 = pneg %p124
        $region26: #{tpu_custom_call.1} parent=11 // pred_check_branch
          %176 = sbr.rel (%p174) target = $region28
        $region27: #{tpu_custom_call.1} parent=11 // pred_region
          _
        $region28: #{tpu_custom_call.1} parent=11 // pred_fallthru
          _
      $region12: #{tpu_custom_call.1} parent=5 // pred_fallthru
        _
      %p177 = scmp.lt.s32.totalorder %s14, 2
      // Predicated region
      $region29: #{tpu_custom_call.1} parent=5 // pred_check
        %p178 = pneg %p177
      $region30: #{tpu_custom_call.1} parent=5 // pred_check_branch
        %180 = sbr.rel (%p178) target = $region32
      $region31: #{tpu_custom_call.1} parent=5 // pred_region
        // Predicated region
        $region33: #{tpu_custom_call.1} parent=31 // pred_check
          %p181 = pneg %p34
        $region34: #{tpu_custom_call.1} parent=31 // pred_check_branch
          %183 = sbr.rel (%p181) target = $region36
        $region35: #{tpu_custom_call.1} parent=31 // pred_region
          %s184 = smul.u32 2, %s14
          %p185 = scmp.lt.s32.totalorder %s184, 3
          %s186 = scalar_select %p185, %s184, 3
          %s187 = smul.addr %s186, 8
          %s188 = scalar_lea.vmem %s0, %s187
          %s189 = smul.u32 2, %s14
        $region36: #{tpu_custom_call.1} parent=31 // pred_fallthru
          _
      $region32: #{tpu_custom_call.1} parent=5 // pred_fallthru
        _
      %p190 = scmp.le.s32.totalorder 1, %s14
      %p191 = scmp.lt.s32.totalorder %s14, 3
      %p192 = pnand %p190, %p191
      %p193 = pneg %p192
      // Predicated region
      $region37: #{tpu_custom_call.1} parent=5 // pred_check
        _
      $region38: #{tpu_custom_call.1} parent=5 // pred_check_branch
        %195 = sbr.rel (%p192) target = $region40
      $region39: #{tpu_custom_call.1} parent=5 // pred_region
        %s196 = ssub.s32 %s14, 1
        %s197 = smul.u32 2, %s19
        %p198 = scmp.lt.s32.totalorder %s197, 3
        %s199 = scalar_select %p198, %s197, 3
        %s200 = smul.addr %s199, 8
        %s201 = scalar_lea.vmem %s0, %s200
        %p202 = pneg %p40
        %p203 = pneg %p37
        %p204 = pneg %p61
        %p205 = pneg %p58
        %p206 = pneg %p82
        %p207 = pneg %p79
        %p208 = pneg %p103
        %p209 = pneg %p100
        %p210 = pneg %p124
        %p211 = pneg %p121
        %p212 = pneg %p150
        %p213 = pneg %p147
        %s214 = sand.u32 %s137, 1
        %s215 = scalar_lea.sflag [#allocation3], %s214
        %s216 = sand.u32 %s137, 1
        %s217 = smul.addr %s216, 16
        %s218 = scalar_lea.vmem [#allocation2], %s217
        %s219 = smul.u32 2, %s19
        %p220 = scmp.lt.s32.totalorder %s219, 3
        %s221 = scalar_select %p220, %s219, 3
        %s222 = smul.addr %s221, 8
        %s223 = scalar_lea.vmem %s0, %s222
        %s224 = smul.u32 2, %s19
        %s225 = smul.u32 2, %s19
        %v226 = vld [vmem:[%s223] sm:$0xff]
        %v227 = vld [vmem:[%s223 + $0x8] sm:$0xff]
        %v228 = vld [vmem:[%s1] sm:$0xff]
        %v229 = vld [vmem:[%s1 + $0x8] sm:$0xff]
        %v230 = vld [vmem:[%s1 + $0x10] sm:$0xff]
        %v231 = vld [vmem:[%s1 + $0x18] sm:$0xff]
        %v232 = vld [vmem:[%s2] sm:$0x1]
        %v234 = vlaneseq
        %v235 = vshrl.u32 %v234, 7
        %v236 = vsub.s32 0, %v235
        %v237 = vrot.slane %v232, %v236
        %vm239 = vcmask 261120
        %v241 = vsel %vm239, %v226, 0
        %v244 = vsel %vm239, %v227, 0
        %246 = vmatprep.subr.mxu0 0.0
        %247 = vmatpush1.msra.mxu0 %v228
        %248 = vmatprep.subr.mxu0 0.0
        %249 = vmatpush1.msra.mxu0 %v229
        %250 = vmatprep.subr.mxu0 0.0
        %251 = vmatpush1.msra.mxu0 %v230
        %252 = vmatprep.subr.mxu0 0.0
        %253 = vmatpush1.msra.mxu0 %v231
        %254 = vmatprep.subr.mxu0 0.0
        %255 = vmatpush1.msra.mxu0 0.0
        %256 = vmatprep.subr.mxu0 0.0
        %257 = vmatpush1.msra.mxu0 0.0
        %258 = vmatprep.subr.mxu0 0.0
        %259 = vmatpush1.msra.mxu0 0.0
        %260 = vmatprep.subr.mxu0 0.0
        %261 = vmatpush1.msra.mxu0 0.0
        %262 = vmatprep.subr.mxu0 0.0
        %263 = vmatpush1.msra.mxu0 0.0
        %264 = vmatprep.subr.mxu0 0.0
        %265 = vmatpush1.msra.mxu0 0.0
        %266 = vmatprep.subr.mxu0 0.0
        %267 = vmatpush1.msra.mxu0 0.0
        %268 = vmatprep.subr.mxu0 0.0
        %269 = vmatpush1.msra.mxu0 0.0
        %270 = vmatprep.subr.mxu0 0.0
        %271 = vmatpush1.msra.mxu0 0.0
        %272 = vmatprep.subr.mxu0 0.0
        %273 = vmatpush1.msra.mxu0 0.0
        %274 = vmatprep.subr.mxu0 0.0
        %275 = vmatpush1.msra.mxu0 0.0
        %276 = vmatprep.subr.mxu0 0.0
        %277 = vmatpush1.msra.mxu0 0.0
        %278 = vmatprep.subr.mxu0 0.0
        %279 = vmatpush1.msra.mxu0 0.0
        %280 = vmatprep.subr.mxu0 0.0
        %281 = vmatpush1.msra.mxu0 0.0
        %282 = vmatprep.subr.mxu0 0.0
        %283 = vmatpush1.msra.mxu0 0.0
        %284 = vmatprep.subr.mxu0 0.0
        %285 = vmatpush1.msra.mxu0 0.0
        %286 = vmatprep.subr.mxu0 0.0
        %287 = vmatpush1.msra.mxu0 0.0
        %288 = vmatprep.subr.mxu0 0.0
        %289 = vmatpush1.msra.mxu0 0.0
        %290 = vmatprep.subr.mxu0 0.0
        %291 = vmatpush1.msra.mxu0 0.0
        %292 = vmatprep.subr.mxu0 0.0
        %293 = vmatpush1.msra.mxu0 0.0
        %294 = vmatprep.subr.mxu0 0.0
        %295 = vmatpush1.msra.mxu0 0.0
        %296 = vmatprep.subr.mxu0 0.0
        %297 = vmatpush1.msra.mxu0 0.0
        %298 = vmatprep.subr.mxu0 0.0
        %299 = vmatpush1.msra.mxu0 0.0
        %300 = vmatprep.subr.mxu0 0.0
        %301 = vmatpush1.msra.mxu0 0.0
        %302 = vmatprep.subr.mxu0 0.0
        %303 = vmatpush1.msra.mxu0 0.0
        %304 = vmatprep.subr.mxu0 0.0
        %305 = vmatpush1.msra.mxu0 0.0
        %306 = vmatprep.subr.mxu0 0.0
        %307 = vmatpush1.msra.mxu0 0.0
        %308 = vmatprep.subr.mxu0 0.0
        %309 = vmatpush1.msra.mxu0 0.0
        %310 = vmatprep.mubr.f32.mxu0 0.0
        %311 = vmatmul.mubr.f32.gmra.mrb[0].mxu0 %v241
        %v312 = vpop.f32.mrb[0].mxu0
        %v313 = vadd.f32 %v237, %v312
        %v314 = vpop.f32.mrb[0].mxu0
        %315 = vmatprep.mubr.f32.mxu0 0.0
        %316 = vmatmul.mubr.f32.gmra.mrb[0].mxu0 %v244
        %v317 = vpop.f32.mrb[0].mxu0
        %v318 = vadd.f32 %v237, %v317
        %v319 = vpop.f32.mrb[0].mxu0
        %320 = vdwg.mxu0
        %v321 = vmul.f32 %v313, %v313
        %v322 = vmul.f32 %v318, %v318
        %v323 = vmul.f32 %v313, 0.7978846
        %v324 = vmul.f32 %v318, 0.7978846
        %v325 = vmul.f32 %v321, 0.044715
        %v326 = vmul.f32 %v322, 0.044715
        %v327 = vadd.f32 %v325, 1.0
        %v328 = vadd.f32 %v326, 1.0
        %v329 = vmul.f32 %v323, %v327
        %v330 = vmul.f32 %v324, %v328
        %v331 = vmul.f32 %v313, 0.5
        %v332 = vmul.f32 %v318, 0.5
        %v333 = vtanh.pop %v329
        %v334 = vtanh.pop %v330
        %v335 = vadd.f32 %v333, 1.0
        %v336 = vadd.f32 %v334, 1.0
        %v337 = vmul.f32 %v331, %v335
        %v338 = vmul.f32 %v332, %v336
        %v339 = vld [vmem:[%s3] sm:$0xff]
        %v340 = vld [vmem:[%s3 + $0x8] sm:$0xff]
        %v341 = vld [vmem:[%s3 + $0x10] sm:$0xff]
        %v342 = vld [vmem:[%s3 + $0x18] sm:$0xff]
        %v343 = vld [vmem:[%s3 + $0x20] sm:$0xff]
        %v344 = vld [vmem:[%s3 + $0x28] sm:$0xff]
        %v345 = vld [vmem:[%s3 + $0x30] sm:$0xff]
        %v346 = vld [vmem:[%s3 + $0x38] sm:$0xff]
        %v347 = vld [vmem:[%s4] sm:$0x1]
        %v349 = vlaneseq
        %v350 = vshrl.u32 %v349, 7
        %v351 = vsub.s32 0, %v350
        %v352 = vrot.slane %v347, %v351
        %vm354 = vcmask 523264
        %v356 = vsel %vm354, %v337, 0
        %v359 = vsel %vm354, %v338, 0
        %361 = vmatprep.subr.mxu0 0.0
        %362 = vmatpush1.msra.mxu0 %v339
        %363 = vmatprep.subr.mxu0 0.0
        %364 = vmatpush1.msra.mxu0 %v340
        %365 = vmatprep.subr.mxu0 0.0
        %366 = vmatpush1.msra.mxu0 %v341
        %367 = vmatprep.subr.mxu0 0.0
        %368 = vmatpush1.msra.mxu0 %v342
        %369 = vmatprep.subr.mxu0 0.0
        %370 = vmatpush1.msra.mxu0 %v343
        %371 = vmatprep.subr.mxu0 0.0
        %372 = vmatpush1.msra.mxu0 %v344
        %373 = vmatprep.subr.mxu0 0.0
        %374 = vmatpush1.msra.mxu0 %v345
        %375 = vmatprep.subr.mxu0 0.0
        %376 = vmatpush1.msra.mxu0 %v346
        %377 = vmatprep.subr.mxu0 0.0
        %378 = vmatpush1.msra.mxu0 0.0
        %379 = vmatprep.subr.mxu0 0.0
        %380 = vmatpush1.msra.mxu0 0.0
        %381 = vmatprep.subr.mxu0 0.0
        %382 = vmatpush1.msra.mxu0 0.0
        %383 = vmatprep.subr.mxu0 0.0
        %384 = vmatpush1.msra.mxu0 0.0
        %385 = vmatprep.subr.mxu0 0.0
        %386 = vmatpush1.msra.mxu0 0.0
        %387 = vmatprep.subr.mxu0 0.0
        %388 = vmatpush1.msra.mxu0 0.0
        %389 = vmatprep.subr.mxu0 0.0
        %390 = vmatpush1.msra.mxu0 0.0
        %391 = vmatprep.subr.mxu0 0.0
        %392 = vmatpush1.msra.mxu0 0.0
        %393 = vmatprep.subr.mxu0 0.0
        %394 = vmatpush1.msra.mxu0 0.0
        %395 = vmatprep.subr.mxu0 0.0
        %396 = vmatpush1.msra.mxu0 0.0
        %397 = vmatprep.subr.mxu0 0.0
        %398 = vmatpush1.msra.mxu0 0.0
        %399 = vmatprep.subr.mxu0 0.0
        %400 = vmatpush1.msra.mxu0 0.0
        %401 = vmatprep.subr.mxu0 0.0
        %402 = vmatpush1.msra.mxu0 0.0
        %403 = vmatprep.subr.mxu0 0.0
        %404 = vmatpush1.msra.mxu0 0.0
        %405 = vmatprep.subr.mxu0 0.0
        %406 = vmatpush1.msra.mxu0 0.0
        %407 = vmatprep.subr.mxu0 0.0
        %408 = vmatpush1.msra.mxu0 0.0
        %409 = vmatprep.subr.mxu0 0.0
        %410 = vmatpush1.msra.mxu0 0.0
        %411 = vmatprep.subr.mxu0 0.0
        %412 = vmatpush1.msra.mxu0 0.0
        %413 = vmatprep.subr.mxu0 0.0
        %414 = vmatpush1.msra.mxu0 0.0
        %415 = vmatprep.subr.mxu0 0.0
        %416 = vmatpush1.msra.mxu0 0.0
        %417 = vmatprep.subr.mxu0 0.0
        %418 = vmatpush1.msra.mxu0 0.0
        %419 = vmatprep.subr.mxu0 0.0
        %420 = vmatpush1.msra.mxu0 0.0
        %421 = vmatprep.subr.mxu0 0.0
        %422 = vmatpush1.msra.mxu0 0.0
        %423 = vmatprep.subr.mxu0 0.0
        %424 = vmatpush1.msra.mxu0 0.0
        %425 = vmatprep.mubr.f32.mxu0 0.0
        %426 = vmatmul.mubr.f32.gmra.mrb[0].mxu0 %v356
        %v427 = vpop.f32.mrb[0].mxu0
        %v428 = vadd.f32 %v352, %v427
        %v429 = vpop.f32.mrb[0].mxu0
        %430 = vmatprep.mubr.f32.mxu0 0.0
        %431 = vmatmul.mubr.f32.gmra.mrb[0].mxu0 %v359
        %v432 = vpop.f32.mrb[0].mxu0
        %v433 = vadd.f32 %v352, %v432
        %v434 = vpop.f32.mrb[0].mxu0
        %435 = vdwg.mxu0
        %436 = vst.msk [vmem:[%s218] sm:$0xff] %vm239, %v428
        %437 = vst.msk [vmem:[%s218 + $0x8] sm:$0xff] %vm239, %v433
        %s438 = sand.u32 %s137, 1
        %s439 = scalar_lea.sflag [#allocation3], %s438
        %s440 = sand.u32 %s137, 1
        %s441 = smul.addr %s440, 16
        %s442 = scalar_lea.vmem [#allocation2], %s441
        // Predicated region
        $region41: #{tpu_custom_call.1} parent=39 // pred_check
          %p443 = pneg %p147
        $region42: #{tpu_custom_call.1} parent=39 // pred_check_branch
          %445 = sbr.rel (%p443) target = $region44
        $region43: #{tpu_custom_call.1} parent=39 // pred_region
          %s446 = smul.u32 2, %s19
          %s448 = ssub.s32 256, 256
          %449 = vsyncadd %s439, %s448
          %s450 = smul.addr %s446, 128
          %s451 = scalar_lea.hbm %s5, %s450
          %s452 = sshll.u32 %s442, 4
          %s453 = int_to_ptr.vmem [resolvable:$true] %s452
          %458 = dma.vmem_to_hbm [thread:$0]  %s453, 256, %s451, %s439, 128, 128, 8
        $region44: #{tpu_custom_call.1} parent=39 // pred_fallthru
          _
      $region40: #{tpu_custom_call.1} parent=5 // pred_fallthru
        _
      %p459 = scmp.le.s32.totalorder 2, %s14
      // Predicated region
      $region45: #{tpu_custom_call.1} parent=5 // pred_check
        %p460 = pneg %p459
      $region46: #{tpu_custom_call.1} parent=5 // pred_check_branch
        %462 = sbr.rel (%p460) target = $region48
      $region47: #{tpu_custom_call.1} parent=5 // pred_region
        %s463 = ssub.s32 %s14, 2
        // Predicated region
        $region49: #{tpu_custom_call.1} parent=47 // pred_check
          %p464 = pneg %p153
        $region50: #{tpu_custom_call.1} parent=47 // pred_check_branch
          %466 = sbr.rel (%p464) target = $region52
        $region51: #{tpu_custom_call.1} parent=47 // pred_region
          %s467 = sand.u32 %s138, 1
          %s468 = scalar_lea.sflag [#allocation3], %s467
          %s469 = sand.u32 %s138, 1
          %s470 = smul.addr %s469, 16
          %s471 = scalar_lea.vmem [#allocation2], %s470
          %472 = dma.done %s468, 256
        $region52: #{tpu_custom_call.1} parent=47 // pred_fallthru
          _
      $region48: #{tpu_custom_call.1} parent=5 // pred_fallthru
        _
    $region6: #{tpu_custom_call.1} parent=1 // loop_footer
      %s18 = sadd.s32 1, %s14
    $region7: #{tpu_custom_call.1} parent=1 // loop_footer_branch
      %13 = sbr.rel target = $region3
    $region8: #{tpu_custom_call.1} parent=1 // loop_exit
      _
    %473 = vsyncpa [#allocation3], 1
    %s474 = scalar_lea.sflag [#allocation3], 1
    %475 = vsyncpa %s474, 1

</llo_original>
